<compile_context>
chip_gen: v6e
topology: v6e:2x2x1
jax: 0.10.0
libtpu: 0.0.40
codegen_flags: <defaults>
</compile_context>

<pallas_src>
import jax
import jax.numpy as jnp
from jax.experimental import pallas as pl
from jax.experimental.pallas import tpu as pltpu


def _round_up(x, m):
    return ((x + m - 1) // m) * m


def _vmem_capacity_bytes():
    """Per-core VMEM capacity; conservative 64 MiB fallback (v7x per-TC)."""
    try:
        info = pltpu.get_tpu_info()
        cap = getattr(info, "vmem_capacity_bytes", None)
        if cap:
            return int(cap)
    except Exception:
        pass
    return 64 << 20


def _make_highway_kernel(activation):
    if activation == "selu":
        act = jax.nn.selu
    elif activation == "elu":
        act = jax.nn.elu
    else:  # 'relu' (default in the PyTorch module)
        act = lambda v: jnp.maximum(v, 0.0)

    def kernel(x_ref, w_ref, b_ref, o_ref):
        # x: (tile_b, D_pad)  full feature width (feeds MXU + residual slice)
        # w: (D_pad, 2*tile_n)  [fc_cols_j | gate_cols_j], bf16
        # b: (1, 2*tile_n)      f32
        # o: (tile_b, tile_n)
        tile_n = o_ref.shape[-1]
        j = pl.program_id(0)                       # n-tile index (outer axis)

        xw = x_ref[...].astype(w_ref.dtype)        # bf16 into the MXU
        y = jnp.dot(xw, w_ref[...], preferred_element_type=jnp.float32)
        y = y + b_ref[...].astype(jnp.float32)

        h = act(y[:, :tile_n])                     # fc branch (VPU)
        t = jax.nn.sigmoid(y[:, tile_n:])          # gate branch (EUP)

        # Residual x columns for this n-tile, sliced from the tile already in
        # VMEM (no second x input / extra HBM read).
        start = pl.multiple_of(j * tile_n, 128)
        xr = x_ref[:, pl.ds(start, tile_n)].astype(jnp.float32)

        o_ref[...] = (xr + t * (h - xr)).astype(o_ref.dtype)

    return kernel


def highway_fc_prepack(w_fc, b_fc, w_gate, b_gate, *,
                       weight_dtype=jnp.bfloat16, tile_n_max=512):
    """Pack weights ONCE per weight set (hoisted out of the per-call path).

    w_*: (D, D) stored as (in, out); b_*: (D,).
    Returns a dict consumed by highway_fc().
    """
    D, Dout = w_fc.shape
    assert Dout == D and w_gate.shape == (D, D), (
        "highway residual x*(1-T) requires indim == outdim")
    assert b_fc.shape == (D,) and b_gate.shape == (D,)

    D_pad = _round_up(D, 128)                     # lane-dense feature width
    wi = jnp.dtype(weight_dtype).itemsize

    # VMEM-aware tile_n: double-buffered weight slab must fit half the budget.
    cap = _vmem_capacity_bytes()
    usable = min(cap * 3 // 4, 96 << 20)          # leave compiler headroom
    weight_budget = usable // 2
    tile_n = 128
    for c in sorted({c for c in (512, 384, 256, 128)
                     if c <= tile_n_max and D_pad % c == 0}, reverse=True):
        if 2 * D_pad * 2 * c * wi <= weight_budget:
            tile_n = c
            break
    # For extreme D where even tile_n=128 overflows the budget, a K-tiled
    # accumulator (extra innermost grid axis + f32 scratch) would bound the
    # slab; not needed for the shapes exercised here.
    n_tiles = D_pad // tile_n

    wf = jnp.pad(w_fc, ((0, D_pad - D), (0, D_pad - D)))
    wg = jnp.pad(w_gate, ((0, D_pad - D), (0, D_pad - D)))
    bf = jnp.pad(b_fc, (0, D_pad - D))
    bg = jnp.pad(b_gate, (0, D_pad - D))

    # Interleave per n-tile: columns = [fc_blk0 | gate_blk0 | fc_blk1 | ...]
    w_cat = jnp.stack(
        [wf.reshape(D_pad, n_tiles, tile_n), wg.reshape(D_pad, n_tiles, tile_n)],
        axis=2).reshape(D_pad, 2 * D_pad).astype(weight_dtype)
    b_cat = jnp.stack(
        [bf.reshape(n_tiles, tile_n), bg.reshape(n_tiles, tile_n)],
        axis=1).reshape(1, 2 * D_pad).astype(jnp.float32)

    return dict(w_cat=w_cat, b_cat=b_cat, D=D, D_pad=D_pad, tile_n=tile_n,
                usable_vmem=int(usable), vmem_cap=int(cap))


def highway_fc(x, packed, *, activation="relu", tile_b_max=256):
    """x: (B, D); packed: output of highway_fc_prepack. Returns (B, D)."""
    B, D = x.shape
    assert D == packed["D"], "x feature dim must match packed weights"
    D_pad, tile_n = packed["D_pad"], packed["tile_n"]
    n_tiles = D_pad // tile_n

    xi = jnp.dtype(x.dtype).itemsize
    oi = xi
    wi = jnp.dtype(packed["w_cat"].dtype).itemsize
    sub = {1: 32, 2: 16, 4: 8}.get(xi, 8)         # sublane minimum per dtype

    # ---- batch tile: VMEM-aware cap + padding-waste minimization -----------
    usable = packed["usable_vmem"]
    w_fp = 2 * D_pad * 2 * tile_n * wi + 2 * 2 * tile_n * 4   # W + bias (x2 bufs)
    rest = max(usable - w_fp, 4 << 20)
    per_row = 2 * D_pad * xi + 2 * tile_n * oi                # x + out per row (x2 bufs)
    cap_rows = max(sub, (rest // per_row) // sub * sub)
    limit = min(tile_b_max, cap_rows)
    if B <= limit:
        tile_b = _round_up(B, sub)
    else:
        cands = list(range(128, int(limit) + 1, 128))
        if not cands:
            cands = [max(sub, (int(limit) // sub) * sub)]
        tile_b = min(cands, key=lambda c: (_round_up(B, c) - B, -c))
    B_pad = _round_up(B, tile_b)
    b_tiles = B_pad // tile_b

    xp = jnp.pad(x, ((0, B_pad - B), (0, D_pad - D)))

    # ---- explicit VMEM budget (footprint already includes 2x buffering) ----
    fp = 2 * tile_b * D_pad * xi + w_fp + 2 * tile_b * tile_n * oi
    vmem_limit = int(min(max(fp + (2 << 20), 16 << 20), packed["vmem_cap"]))

    cost = pl.CostEstimate(
        flops=int(2 * B_pad * D_pad * (2 * D_pad) + 8 * B_pad * D_pad),
        transcendentals=int(B_pad * D_pad),
        bytes_accessed=int(n_tiles * B_pad * D_pad * xi          # x streamed per n-tile
                           + D_pad * 2 * D_pad * wi              # packed W once
                           + 2 * D_pad * 4                       # packed bias
                           + B_pad * D_pad * oi),                # output
    )

    kernel = _make_highway_kernel(activation)
    out_padded = pl.pallas_call(
        kernel,
        out_shape=jax.ShapeDtypeStruct((B_pad, D_pad), x.dtype),
        grid_spec=pltpu.PrefetchScalarGridSpec(
            num_scalar_prefetch=0,
            # n-tiles outer, batch inner -> weight slab indexed only by the
            # outer axis stays resident across all batch tiles (no re-DMA).
            grid=(n_tiles, b_tiles),
            in_specs=[
                pl.BlockSpec((tile_b, D_pad), lambda j, i: (i, 0)),       # x
                pl.BlockSpec((D_pad, 2 * tile_n), lambda j, i: (0, j)),   # fused W
                pl.BlockSpec((1, 2 * tile_n), lambda j, i: (0, j)),       # fused b
            ],
            out_specs=pl.BlockSpec((tile_b, tile_n), lambda j, i: (i, j)),
        ),
        compiler_params=pltpu.CompilerParams(
            dimension_semantics=("parallel", "parallel"),
            vmem_limit_bytes=vmem_limit,
        ),
        cost_estimate=cost,
    )(xp, packed["w_cat"], packed["b_cat"])

    return out_padded[:B, :D]


def highway_fc_ref(x, w_fc, b_fc, w_gate, b_gate, activation="relu"):
    if activation == "selu":
        act = jax.nn.selu
    elif activation == "elu":
        act = jax.nn.elu
    else:
        act = lambda v: jnp.maximum(v, 0.0)
    hi = jax.lax.Precision.HIGHEST
    h = act(jnp.dot(x, w_fc, precision=hi) + b_fc)
    t = jax.nn.sigmoid(jnp.dot(x, w_gate, precision=hi) + b_gate)
    return h * t + x * (1.0 - t)


if __name__ == "__main__":
    gate_bias_init = -1.0          # PyTorch: self.gate.bias.data.fill_(-1)
    key = jax.random.PRNGKey(0)

    def make_case(k, B, D):
        kx, kwf, kbf, kwg = jax.random.split(k, 4)
        bound = 1.0 / (D ** 0.5)
        x = jax.random.normal(kx, (B, D), dtype=jnp.float32)
        w_fc = jax.random.uniform(kwf, (D, D), jnp.float32, -bound, bound)
        b_fc = jax.random.uniform(kbf, (D,), jnp.float32, -bound, bound)
        w_gate = jax.random.uniform(kwg, (D, D), jnp.float32, -bound, bound)
        b_gate = jnp.full((D,), gate_bias_init, dtype=jnp.float32)
        return x, w_fc, b_fc, w_gate, b_gate

    k1, k2, k3 = jax.random.split(key, 3)
    cases = [
        make_case(k1, 128, 128),    # lane/MXU-aligned, single tile
        make_case(k2, 8, 32),       # tiny module-like shape (padding path)
        make_case(k3, 300, 1024),   # multi n-tile + waste-aware batch tiling
    ]

    for x, w_fc, b_fc, w_gate, b_gate in cases:
        packed = highway_fc_prepack(w_fc, b_fc, w_gate, b_gate)  # pack once
        out = jax.block_until_ready(highway_fc(x, packed))
        ref = highway_fc_ref(x, w_fc, b_fc, w_gate, b_gate)
        assert out.shape == ref.shape
        # Kernel uses explicit bf16 MXU operands (f32 accumulate); reference
        # uses HIGHEST precision, so allow O(sqrt(D) * 2^-9) rounding noise.
        assert jnp.allclose(out, ref, atol=2e-2, rtol=1e-2), (
            float(jnp.max(jnp.abs(out - ref))))

    print("KERNEL_OK")
</pallas_src>

<mosaic_0001>
module attributes {stable_mosaic.version = 11 : i64} {
  func.func @kernel(%arg0: i32, %arg1: i32, %arg2: memref<128x128xf32, #tpu.memory_space<vmem>>, %arg3: memref<128x256xbf16, #tpu.memory_space<vmem>>, %arg4: memref<1x256xf32, #tpu.memory_space<vmem>>, %arg5: memref<128x128xf32, #tpu.memory_space<vmem>>) attributes {dimension_semantics = [#tpu.dimension_semantics<parallel>, #tpu.dimension_semantics<parallel>], iteration_bounds = array<i64: 1, 1>, scalar_prefetch = 0 : i64, scratch_operands = 0 : i64, tpu.core_type = #tpu.core_type<tc>, window_params = [{transform_indices = @transform_0, window_bounds = array<i64: 128, 128>}, {transform_indices = @transform_1, window_bounds = array<i64: 128, 256>}, {transform_indices = @transform_2, window_bounds = array<i64: 1, 256>}, {transform_indices = @transform_3, window_bounds = array<i64: 128, 128>}]} {
    %c0 = arith.constant 0 : index
    %c0_0 = arith.constant 0 : index
    %0 = vector.load %arg2[%c0, %c0_0] : memref<128x128xf32, #tpu.memory_space<vmem>>, vector<128x128xf32>
    %1 = arith.truncf %0 : vector<128x128xf32> to vector<128x128xbf16>
    %c0_1 = arith.constant 0 : index
    %c0_2 = arith.constant 0 : index
    %2 = vector.load %arg3[%c0_1, %c0_2] : memref<128x256xbf16, #tpu.memory_space<vmem>>, vector<128x256xbf16>
    %cst = arith.constant dense<0.000000e+00> : vector<128x256xf32>
    %3 = tpu.matmul %1, %2, %cst {dimension_numbers = #tpu.dot_dimension_numbers<[1], [0], [0], [1], [0, 0, 1, 1], [], []>} : vector<128x128xbf16>, vector<128x256xbf16>, vector<128x256xf32> -> vector<128x256xf32>
    %c0_3 = arith.constant 0 : index
    %c0_4 = arith.constant 0 : index
    %4 = vector.load %arg4[%c0_3, %c0_4] : memref<1x256xf32, #tpu.memory_space<vmem>>, vector<1x256xf32>
    %5 = vector.broadcast %4 : vector<1x256xf32> to vector<128x256xf32>
    %6 = arith.addf %3, %5 : vector<128x256xf32>
    %7 = vector.extract_strided_slice %6 {offsets = [0, 0], sizes = [128, 128], strides = [1, 1]} : vector<128x256xf32> to vector<128x128xf32>
    %cst_5 = arith.constant 0.000000e+00 : f32
    %8 = vector.broadcast %cst_5 : f32 to vector<128x128xf32>
    %9 = arith.maximumf %7, %8 : vector<128x128xf32>
    %10 = vector.extract_strided_slice %6 {offsets = [0, 128], sizes = [128, 128], strides = [1, 1]} : vector<128x256xf32> to vector<128x128xf32>
    %11 = arith.negf %10 : vector<128x128xf32>
    %12 = math.exp %11 : vector<128x128xf32>
    %cst_6 = arith.constant 1.000000e+00 : f32
    %13 = vector.broadcast %cst_6 : f32 to vector<128x128xf32>
    %14 = arith.addf %13, %12 : vector<128x128xf32>
    %15 = arith.divf %13, %14 : vector<128x128xf32>
    %c128_i32 = arith.constant 128 : i32
    %16 = arith.muli %arg0, %c128_i32 : i32
    %17 = tpu.assume_multiple %16, 128 : i32
    %c0_7 = arith.constant 0 : index
    %18 = arith.index_cast %17 : i32 to index
    %19 = vector.load %arg2[%c0_7, %18] : memref<128x128xf32, #tpu.memory_space<vmem>>, vector<128x128xf32>
    %20 = arith.subf %9, %19 : vector<128x128xf32>
    %21 = arith.mulf %15, %20 : vector<128x128xf32>
    %22 = arith.addf %19, %21 : vector<128x128xf32>
    %c0_8 = arith.constant 0 : index
    %c0_9 = arith.constant 0 : index
    %23 = vector.load %arg5[%c0_8, %c0_9] : memref<128x128xf32, #tpu.memory_space<vmem>>, vector<128x128xf32>
    tpu.vector_store %arg5[%c0_8, %c0_9], %22 {strides = array<i32>} : memref<128x128xf32, #tpu.memory_space<vmem>>, vector<128x128xf32>,
    return
  }
  func.func @transform_0(%arg0: i32, %arg1: i32) -> (i32, i32) {
    %c0_i32 = arith.constant 0 : i32
    %c0_i32_0 = arith.constant 0 : i32
    return %arg1, %c0_i32 : i32, i32
  }
  func.func @transform_1(%arg0: i32, %arg1: i32) -> (i32, i32) {
    %c0_i32 = arith.constant 0 : i32
    %c0_i32_0 = arith.constant 0 : i32
    return %c0_i32, %arg0 : i32, i32
  }
  func.func @transform_2(%arg0: i32, %arg1: i32) -> (i32, i32) {
    %c0_i32 = arith.constant 0 : i32
    %c0_i32_0 = arith.constant 0 : i32
    return %c0_i32, %arg0 : i32, i32
  }
  func.func @transform_3(%arg0: i32, %arg1: i32) -> (i32, i32) {
    %c0_i32 = arith.constant 0 : i32
    return %arg1, %arg0 : i32, i32
  }
}

</mosaic_0001>

<llo_original>
// kernel: tpu_custom_call.1
$region0: #{tpu_custom_call.1}
  #allocation0 [shape = 'u32[]', space=smem, size = 0x4, offset = 0x4, fixed_abs, tag = 'smem constant byte address 0x4 - core index']
  #allocation1 [shape = 'u32[144,128]{1,0:T(1,128)}', space=vmem, size = 0x12000, scoped, tag = 'internal scratch']
  %s0 = inlined_call_operand.hbm [shape: f32[128,128], index: 0, kind: input, shape index: {}]
  %s1 = inlined_call_operand.hbm [shape: bf16[128,256], index: 1, kind: input, shape index: {}]
  %s2 = inlined_call_operand.vmem [shape: f32[1,256], index: 2, kind: input, shape index: {}]
  %s3 = inlined_call_operand.hbm [shape: f32[128,128], index: 3, kind: output, shape index: {}]
  %s4 = sld [smem:[#allocation0]]
  $region30: #{tpu_custom_call.1} parent=0
    _
  %s6 = ssub.s32 1, %s4
  %s7 = scalar_select 0, %s6, %s4
  $region1: #{tpu_custom_call.1} parent=0
    #allocation2 [shape = 'u8[65536]{0}', space=vmem, size = 0x10000, scoped, tag = 'input window, operand 0, single buffered']
    #allocation3 [shape = 's32[1]{0}', space=sflag, size = 0x4, scoped, tag = 'scoped memory for tpu_custom_call.1']
    #allocation4 [shape = 's32[1]{0}', space=sflag, size = 0x4, scoped, tag = 'scoped memory for tpu_custom_call.1']
    #allocation5 [shape = 'u8[65536]{0}', space=vmem, size = 0x10000, scoped, tag = 'input window, operand 1, single buffered']
    #allocation6 [shape = 's32[1]{0}', space=sflag, size = 0x4, scoped, tag = 'scoped memory for tpu_custom_call.1']
    #allocation7 [shape = 'u8[65536]{0}', space=vmem, size = 0x10000, scoped, tag = 'output window, operand 0, single buffered']
    %8 = vsyncpa [#allocation3], 0
    %9 = vsyncpa [#allocation6], 0
    %10 = vsyncpa [#allocation4], 0
    // Predicated region
    $region2: #{tpu_custom_call.1} parent=1 // pred_check
      _
    $region3: #{tpu_custom_call.1} parent=1 // pred_check_branch
      %12 = sbr.rel (0) target = $region5
    $region4: #{tpu_custom_call.1} parent=1 // pred_region
      %s14 = ssub.s32 2048, 2048
      %15 = vsyncadd [#allocation3], %s14
      %s16 = sshll.u32 [#allocation2], 4
      %s17 = int_to_ptr.vmem [resolvable:$true] %s16
      %22 = dma.hbm_to_vmem [thread:$0]  %s0, 2048, %s17, [#allocation3], 128, 128, 8
    $region5: #{tpu_custom_call.1} parent=1 // pred_fallthru
      _
    // Predicated region
    $region6: #{tpu_custom_call.1} parent=1 // pred_check
      _
    $region7: #{tpu_custom_call.1} parent=1 // pred_check_branch
      %24 = sbr.rel (0) target = $region9
    $region8: #{tpu_custom_call.1} parent=1 // pred_region
      %s26 = ssub.s32 2048, 2048
      %27 = vsyncadd [#allocation6], %s26
      %s28 = sshll.u32 [#allocation5], 4
      %s29 = int_to_ptr.vmem [resolvable:$true] %s28
      %34 = dma.hbm_to_vmem [thread:$0]  %s1, 2048, %s29, [#allocation6], 128, 128, 8
    $region9: #{tpu_custom_call.1} parent=1 // pred_fallthru
      _
    // Predicated region
    $region10: #{tpu_custom_call.1} parent=1 // pred_check
      _
    $region11: #{tpu_custom_call.1} parent=1 // pred_check_branch
      %36 = sbr.rel (0) target = $region13
    $region12: #{tpu_custom_call.1} parent=1 // pred_region
      _
    $region13: #{tpu_custom_call.1} parent=1 // pred_fallthru
      _
    // Predicated region
    $region14: #{tpu_custom_call.1} parent=1 // pred_check
      _
    $region15: #{tpu_custom_call.1} parent=1 // pred_check_branch
      %38 = sbr.rel (0) target = $region17
    $region16: #{tpu_custom_call.1} parent=1 // pred_region
      %39 = dma.done [#allocation3], 2048
    $region17: #{tpu_custom_call.1} parent=1 // pred_fallthru
      _
    // Predicated region
    $region18: #{tpu_custom_call.1} parent=1 // pred_check
      _
    $region19: #{tpu_custom_call.1} parent=1 // pred_check_branch
      %41 = sbr.rel (0) target = $region21
    $region20: #{tpu_custom_call.1} parent=1 // pred_region
      %42 = dma.done [#allocation6], 2048
    $region21: #{tpu_custom_call.1} parent=1 // pred_fallthru
      _
    %v44 = vld [vmem:[#allocation2] sm:$0xff]
    %v45 = vld [vmem:[#allocation2 + $0x8] sm:$0xff]
    %v46 = vld [vmem:[#allocation2 + $0x10] sm:$0xff]
    %v47 = vld [vmem:[#allocation2 + $0x18] sm:$0xff]
    %v48 = vld [vmem:[#allocation2 + $0x20] sm:$0xff]
    %v49 = vld [vmem:[#allocation2 + $0x28] sm:$0xff]
    %v50 = vld [vmem:[#allocation2 + $0x30] sm:$0xff]
    %v51 = vld [vmem:[#allocation2 + $0x38] sm:$0xff]
    %v52 = vld [vmem:[#allocation2 + $0x40] sm:$0xff]
    %v53 = vld [vmem:[#allocation2 + $0x48] sm:$0xff]
    %v54 = vld [vmem:[#allocation2 + $0x50] sm:$0xff]
    %v55 = vld [vmem:[#allocation2 + $0x58] sm:$0xff]
    %v56 = vld [vmem:[#allocation2 + $0x60] sm:$0xff]
    %v57 = vld [vmem:[#allocation2 + $0x68] sm:$0xff]
    %v58 = vld [vmem:[#allocation2 + $0x70] sm:$0xff]
    %v59 = vld [vmem:[#allocation2 + $0x78] sm:$0xff]
    %v60 = vpack.c.bf16 %v45, %v44
    %v61 = vpack.c.bf16 %v47, %v46
    %v62 = vpack.c.bf16 %v49, %v48
    %v63 = vpack.c.bf16 %v51, %v50
    %v64 = vpack.c.bf16 %v53, %v52
    %v65 = vpack.c.bf16 %v55, %v54
    %v66 = vpack.c.bf16 %v57, %v56
    %v67 = vpack.c.bf16 %v59, %v58
    %v68 = vld [vmem:[#allocation5] sm:$0xff]
    %v69 = vld [vmem:[#allocation5 + $0x8] sm:$0xff]
    %v70 = vld [vmem:[#allocation5 + $0x10] sm:$0xff]
    %v71 = vld [vmem:[#allocation5 + $0x18] sm:$0xff]
    %v72 = vld [vmem:[#allocation5 + $0x20] sm:$0xff]
    %v73 = vld [vmem:[#allocation5 + $0x28] sm:$0xff]
    %v74 = vld [vmem:[#allocation5 + $0x30] sm:$0xff]
    %v75 = vld [vmem:[#allocation5 + $0x38] sm:$0xff]
    %v76 = vld [vmem:[#allocation5 + $0x40] sm:$0xff]
    %v77 = vld [vmem:[#allocation5 + $0x48] sm:$0xff]
    %v78 = vld [vmem:[#allocation5 + $0x50] sm:$0xff]
    %v79 = vld [vmem:[#allocation5 + $0x58] sm:$0xff]
    %v80 = vld [vmem:[#allocation5 + $0x60] sm:$0xff]
    %v81 = vld [vmem:[#allocation5 + $0x68] sm:$0xff]
    %v82 = vld [vmem:[#allocation5 + $0x70] sm:$0xff]
    %v83 = vld [vmem:[#allocation5 + $0x78] sm:$0xff]
    %v84 = vld [vmem:[%s2] sm:$0x3]
    %v86 = vlaneseq
    %v87 = vshrl.u32 %v86, 7
    %v88 = vsub.s32 0, %v87
    %v89 = vrot.slane %v84, %v88
    %v90 = vlaneseq
    %v91 = vshrl.u32 %v90, 7
    %v92 = vsub.s32 1, %v91
    %v93 = vrot.slane %v84, %v92
    %v112 = vunpack.c.l.b16 %v68
    %v113 = vunpack.c.h.b16 %v68
    %v114 = vunpack.c.l.b16 %v69
    %v115 = vunpack.c.h.b16 %v69
    %v116 = vunpack.c.l.b16 %v70
    %v117 = vunpack.c.h.b16 %v70
    %v118 = vunpack.c.l.b16 %v71
    %v119 = vunpack.c.h.b16 %v71
    %v120 = vunpack.c.l.b16 %v72
    %v121 = vunpack.c.h.b16 %v72
    %v122 = vunpack.c.l.b16 %v73
    %v123 = vunpack.c.h.b16 %v73
    %v124 = vunpack.c.l.b16 %v74
    %v125 = vunpack.c.h.b16 %v74
    %v126 = vunpack.c.l.b16 %v75
    %v127 = vunpack.c.h.b16 %v75
    %v128 = vunpack.c.l.b16 %v76
    %v129 = vunpack.c.h.b16 %v76
    %v130 = vunpack.c.l.b16 %v77
    %v131 = vunpack.c.h.b16 %v77
    %v132 = vunpack.c.l.b16 %v78
    %v133 = vunpack.c.h.b16 %v78
    %v134 = vunpack.c.l.b16 %v79
    %v135 = vunpack.c.h.b16 %v79
    %v136 = vunpack.c.l.b16 %v80
    %v137 = vunpack.c.h.b16 %v80
    %v138 = vunpack.c.l.b16 %v81
    %v139 = vunpack.c.h.b16 %v81
    %v140 = vunpack.c.l.b16 %v82
    %v141 = vunpack.c.h.b16 %v82
    %v142 = vunpack.c.l.b16 %v83
    %v143 = vunpack.c.h.b16 %v83
    %v144 = vpack.c.b16 %v114, %v112
    %v145 = vpack.c.b16 %v115, %v113
    %v146 = vpack.c.b16 %v118, %v116
    %v147 = vpack.c.b16 %v119, %v117
    %v148 = vpack.c.b16 %v122, %v120
    %v149 = vpack.c.b16 %v123, %v121
    %v150 = vpack.c.b16 %v126, %v124
    %v151 = vpack.c.b16 %v127, %v125
    %v152 = vpack.c.b16 %v130, %v128
    %v153 = vpack.c.b16 %v131, %v129
    %v154 = vpack.c.b16 %v134, %v132
    %v155 = vpack.c.b16 %v135, %v133
    %v156 = vpack.c.b16 %v138, %v136
    %v157 = vpack.c.b16 %v139, %v137
    %v158 = vpack.c.b16 %v142, %v140
    %v159 = vpack.c.b16 %v143, %v141
    %176 = vmatprep.subr.bf16.mxu0 %v159
    %177 = vmatpush1.bf16.msra.mxu0 %v158
    %178 = vmatprep.subr.bf16.mxu0 %v157
    %179 = vmatpush1.bf16.msra.mxu0 %v156
    %180 = vmatprep.subr.bf16.mxu0 %v155
    %181 = vmatpush1.bf16.msra.mxu0 %v154
    %182 = vmatprep.subr.bf16.mxu0 %v153
    %183 = vmatpush1.bf16.msra.mxu0 %v152
    %184 = vmatprep.subr.bf16.mxu0 %v151
    %185 = vmatpush1.bf16.msra.mxu0 %v150
    %186 = vmatprep.subr.bf16.mxu0 %v149
    %187 = vmatpush1.bf16.msra.mxu0 %v148
    %188 = vmatprep.subr.bf16.mxu0 %v147
    %189 = vmatpush1.bf16.msra.mxu0 %v146
    %190 = vmatprep.subr.bf16.mxu0 %v145
    %191 = vmatpush1.bf16.msra.mxu0 %v144
    %192 = vmatprep.subr.bf16.mxu0 0
    %193 = vmatpush2.bf16.msra.mxu0 0
    %194 = vmatprep.subr.bf16.mxu0 0
    %195 = vmatpush2.bf16.msra.mxu0 0
    %196 = vmatprep.subr.bf16.mxu0 0
    %197 = vmatpush2.bf16.msra.mxu0 0
    %198 = vmatprep.subr.bf16.mxu0 0
    %199 = vmatpush2.bf16.msra.mxu0 0
    %200 = vmatprep.subr.bf16.mxu0 0
    %201 = vmatpush2.bf16.msra.mxu0 0
    %202 = vmatprep.subr.bf16.mxu0 0
    %203 = vmatpush2.bf16.msra.mxu0 0
    %204 = vmatprep.subr.bf16.mxu0 0
    %205 = vmatpush2.bf16.msra.mxu0 0
    %206 = vmatprep.subr.bf16.mxu0 0
    %207 = vmatpush2.bf16.msra.mxu0 0
    %208 = vmatprep.mubr.bf16.mxu0 0
    %209 = vmatmul.mubr.bf16.gmra.mxu0 %v60
    %v210 = vpop.f32.mrf.mxu0
    %v211 = vadd.f32 %v89, %v210
    %v212 = vpop.f32.mrf.mxu0
    %v213 = vadd.f32 %v93, %v212
    %v214 = vpop.f32.mrf.mxu0
    %v215 = vadd.f32 %v89, %v214
    %v216 = vpop.f32.mrf.mxu0
    %v217 = vadd.f32 %v93, %v216
    %218 = vmatprep.mubr.bf16.mxu0 0
    %219 = vmatmul.mubr.bf16.gmra.mxu0 %v61
    %v220 = vpop.f32.mrf.mxu0
    %v221 = vadd.f32 %v89, %v220
    %v222 = vpop.f32.mrf.mxu0
    %v223 = vadd.f32 %v93, %v222
    %v224 = vpop.f32.mrf.mxu0
    %v225 = vadd.f32 %v89, %v224
    %v226 = vpop.f32.mrf.mxu0
    %v227 = vadd.f32 %v93, %v226
    %228 = vmatprep.mubr.bf16.mxu0 0
    %229 = vmatmul.mubr.bf16.gmra.mxu0 %v62
    %v230 = vpop.f32.mrf.mxu0
    %v231 = vadd.f32 %v89, %v230
    %v232 = vpop.f32.mrf.mxu0
    %v233 = vadd.f32 %v93, %v232
    %v234 = vpop.f32.mrf.mxu0
    %v235 = vadd.f32 %v89, %v234
    %v236 = vpop.f32.mrf.mxu0
    %v237 = vadd.f32 %v93, %v236
    %238 = vmatprep.mubr.bf16.mxu0 0
    %239 = vmatmul.mubr.bf16.gmra.mxu0 %v63
    %v240 = vpop.f32.mrf.mxu0
    %v241 = vadd.f32 %v89, %v240
    %v242 = vpop.f32.mrf.mxu0
    %v243 = vadd.f32 %v93, %v242
    %v244 = vpop.f32.mrf.mxu0
    %v245 = vadd.f32 %v89, %v244
    %v246 = vpop.f32.mrf.mxu0
    %v247 = vadd.f32 %v93, %v246
    %248 = vmatprep.mubr.bf16.mxu0 0
    %249 = vmatmul.mubr.bf16.gmra.mxu0 %v64
    %v250 = vpop.f32.mrf.mxu0
    %v251 = vadd.f32 %v89, %v250
    %v252 = vpop.f32.mrf.mxu0
    %v253 = vadd.f32 %v93, %v252
    %v254 = vpop.f32.mrf.mxu0
    %v255 = vadd.f32 %v89, %v254
    %v256 = vpop.f32.mrf.mxu0
    %v257 = vadd.f32 %v93, %v256
    %258 = vmatprep.mubr.bf16.mxu0 0
    %259 = vmatmul.mubr.bf16.gmra.mxu0 %v65
    %v260 = vpop.f32.mrf.mxu0
    %v261 = vadd.f32 %v89, %v260
    %v262 = vpop.f32.mrf.mxu0
    %v263 = vadd.f32 %v93, %v262
    %v264 = vpop.f32.mrf.mxu0
    %v265 = vadd.f32 %v89, %v264
    %v266 = vpop.f32.mrf.mxu0
    %v267 = vadd.f32 %v93, %v266
    %268 = vmatprep.mubr.bf16.mxu0 0
    %269 = vmatmul.mubr.bf16.gmra.mxu0 %v66
    %v270 = vpop.f32.mrf.mxu0
    %v271 = vadd.f32 %v89, %v270
    %v272 = vpop.f32.mrf.mxu0
    %v273 = vadd.f32 %v93, %v272
    %v274 = vpop.f32.mrf.mxu0
    %v275 = vadd.f32 %v89, %v274
    %v276 = vpop.f32.mrf.mxu0
    %v277 = vadd.f32 %v93, %v276
    %278 = vmatprep.mubr.bf16.mxu0 0
    %279 = vmatmul.mubr.bf16.gmra.mxu0 %v67
    %v280 = vpop.f32.mrf.mxu0
    %v281 = vadd.f32 %v89, %v280
    %v282 = vpop.f32.mrf.mxu0
    %v283 = vadd.f32 %v93, %v282
    %v284 = vpop.f32.mrf.mxu0
    %v285 = vadd.f32 %v89, %v284
    %v286 = vpop.f32.mrf.mxu0
    %v287 = vadd.f32 %v93, %v286
    %288 = vdwg.mxu0
    %v289 = vmax.f32 %v211, 0.0
    %v290 = vmax.f32 %v215, 0.0
    %v291 = vmax.f32 %v221, 0.0
    %v292 = vmax.f32 %v225, 0.0
    %v293 = vmax.f32 %v231, 0.0
    %v294 = vmax.f32 %v235, 0.0
    %v295 = vmax.f32 %v241, 0.0
    %v296 = vmax.f32 %v245, 0.0
    %v297 = vmax.f32 %v251, 0.0
    %v298 = vmax.f32 %v255, 0.0
    %v299 = vmax.f32 %v261, 0.0
    %v300 = vmax.f32 %v265, 0.0
    %v301 = vmax.f32 %v271, 0.0
    %v302 = vmax.f32 %v275, 0.0
    %v303 = vmax.f32 %v281, 0.0
    %v304 = vmax.f32 %v285, 0.0
    %v305 = vxor.u32 %v213, 2147483648
    %v306 = vxor.u32 %v217, 2147483648
    %v307 = vxor.u32 %v223, 2147483648
    %v308 = vxor.u32 %v227, 2147483648
    %v309 = vxor.u32 %v233, 2147483648
    %v310 = vxor.u32 %v237, 2147483648
    %v311 = vxor.u32 %v243, 2147483648
    %v312 = vxor.u32 %v247, 2147483648
    %v313 = vxor.u32 %v253, 2147483648
    %v314 = vxor.u32 %v257, 2147483648
    %v315 = vxor.u32 %v263, 2147483648
    %v316 = vxor.u32 %v267, 2147483648
    %v317 = vxor.u32 %v273, 2147483648
    %v318 = vxor.u32 %v277, 2147483648
    %v319 = vxor.u32 %v283, 2147483648
    %v320 = vxor.u32 %v287, 2147483648
    %v321 = vmul.f32 %v305, 1.442695
    %v322 = vpow.pop %v321
    %v323 = vmul.f32 %v306, 1.442695
    %v324 = vpow.pop %v323
    %v325 = vmul.f32 %v307, 1.442695
    %v326 = vpow.pop %v325
    %v327 = vmul.f32 %v308, 1.442695
    %v328 = vpow.pop %v327
    %v329 = vmul.f32 %v309, 1.442695
    %v330 = vpow.pop %v329
    %v331 = vmul.f32 %v310, 1.442695
    %v332 = vpow.pop %v331
    %v333 = vmul.f32 %v311, 1.442695
    %v334 = vpow.pop %v333
    %v335 = vmul.f32 %v312, 1.442695
    %v336 = vpow.pop %v335
    %v337 = vmul.f32 %v313, 1.442695
    %v338 = vpow.pop %v337
    %v339 = vmul.f32 %v314, 1.442695
    %v340 = vpow.pop %v339
    %v341 = vmul.f32 %v315, 1.442695
    %v342 = vpow.pop %v341
    %v343 = vmul.f32 %v316, 1.442695
    %v344 = vpow.pop %v343
    %v345 = vmul.f32 %v317, 1.442695
    %v346 = vpow.pop %v345
    %v347 = vmul.f32 %v318, 1.442695
    %v348 = vpow.pop %v347
    %v349 = vmul.f32 %v319, 1.442695
    %v350 = vpow.pop %v349
    %v351 = vmul.f32 %v320, 1.442695
    %v352 = vpow.pop %v351
    %v353 = vadd.f32 %v322, 1.0
    %v354 = vadd.f32 %v324, 1.0
    %v355 = vadd.f32 %v326, 1.0
    %v356 = vadd.f32 %v328, 1.0
    %v357 = vadd.f32 %v330, 1.0
    %v358 = vadd.f32 %v332, 1.0
    %v359 = vadd.f32 %v334, 1.0
    %v360 = vadd.f32 %v336, 1.0
    %v361 = vadd.f32 %v338, 1.0
    %v362 = vadd.f32 %v340, 1.0
    %v363 = vadd.f32 %v342, 1.0
    %v364 = vadd.f32 %v344, 1.0
    %v365 = vadd.f32 %v346, 1.0
    %v366 = vadd.f32 %v348, 1.0
    %v367 = vadd.f32 %v350, 1.0
    %v368 = vadd.f32 %v352, 1.0
    %v369 = vrcp.pop %v353
    %v370 = vmul.f32 1.0, %v369
    %v371 = vrcp.pop %v354
    %v372 = vmul.f32 1.0, %v371
    %v373 = vrcp.pop %v355
    %v374 = vmul.f32 1.0, %v373
    %v375 = vrcp.pop %v356
    %v376 = vmul.f32 1.0, %v375
    %v377 = vrcp.pop %v357
    %v378 = vmul.f32 1.0, %v377
    %v379 = vrcp.pop %v358
    %v380 = vmul.f32 1.0, %v379
    %v381 = vrcp.pop %v359
    %v382 = vmul.f32 1.0, %v381
    %v383 = vrcp.pop %v360
    %v384 = vmul.f32 1.0, %v383
    %v385 = vrcp.pop %v361
    %v386 = vmul.f32 1.0, %v385
    %v387 = vrcp.pop %v362
    %v388 = vmul.f32 1.0, %v387
    %v389 = vrcp.pop %v363
    %v390 = vmul.f32 1.0, %v389
    %v391 = vrcp.pop %v364
    %v392 = vmul.f32 1.0, %v391
    %v393 = vrcp.pop %v365
    %v394 = vmul.f32 1.0, %v393
    %v395 = vrcp.pop %v366
    %v396 = vmul.f32 1.0, %v395
    %v397 = vrcp.pop %v367
    %v398 = vmul.f32 1.0, %v397
    %v399 = vrcp.pop %v368
    %v400 = vmul.f32 1.0, %v399
    %s401 = smul.u32 0, 128
    %s402 = sshra.s32 %s401, 7
    %s403 = sand.u32 %s401, 127
    %s404 = scalar_lea.vmem [#allocation2], %s402
    %v405 = vld [vmem:[%s404] sm:$0xff]
    %v406 = vld [vmem:[%s404 + $0x8] sm:$0xff]
    %v407 = vld [vmem:[%s404 + $0x10] sm:$0xff]
    %v408 = vld [vmem:[%s404 + $0x18] sm:$0xff]
    %v409 = vld [vmem:[%s404 + $0x20] sm:$0xff]
    %v410 = vld [vmem:[%s404 + $0x28] sm:$0xff]
    %v411 = vld [vmem:[%s404 + $0x30] sm:$0xff]
    %v412 = vld [vmem:[%s404 + $0x38] sm:$0xff]
    %v413 = vld [vmem:[%s404 + $0x40] sm:$0xff]
    %v414 = vld [vmem:[%s404 + $0x48] sm:$0xff]
    %v415 = vld [vmem:[%s404 + $0x50] sm:$0xff]
    %v416 = vld [vmem:[%s404 + $0x58] sm:$0xff]
    %v417 = vld [vmem:[%s404 + $0x60] sm:$0xff]
    %v418 = vld [vmem:[%s404 + $0x68] sm:$0xff]
    %v419 = vld [vmem:[%s404 + $0x70] sm:$0xff]
    %v420 = vld [vmem:[%s404 + $0x78] sm:$0xff]
    %v421 = vsub.f32 %v289, %v405
    %v422 = vsub.f32 %v290, %v406
    %v423 = vsub.f32 %v291, %v407
    %v424 = vsub.f32 %v292, %v408
    %v425 = vsub.f32 %v293, %v409
    %v426 = vsub.f32 %v294, %v410
    %v427 = vsub.f32 %v295, %v411
    %v428 = vsub.f32 %v296, %v412
    %v429 = vsub.f32 %v297, %v413
    %v430 = vsub.f32 %v298, %v414
    %v431 = vsub.f32 %v299, %v415
    %v432 = vsub.f32 %v300, %v416
    %v433 = vsub.f32 %v301, %v417
    %v434 = vsub.f32 %v302, %v418
    %v435 = vsub.f32 %v303, %v419
    %v436 = vsub.f32 %v304, %v420
    %v437 = vmul.f32 %v370, %v421
    %v438 = vmul.f32 %v372, %v422
    %v439 = vmul.f32 %v374, %v423
    %v440 = vmul.f32 %v376, %v424
    %v441 = vmul.f32 %v378, %v425
    %v442 = vmul.f32 %v380, %v426
    %v443 = vmul.f32 %v382, %v427
    %v444 = vmul.f32 %v384, %v428
    %v445 = vmul.f32 %v386, %v429
    %v446 = vmul.f32 %v388, %v430
    %v447 = vmul.f32 %v390, %v431
    %v448 = vmul.f32 %v392, %v432
    %v449 = vmul.f32 %v394, %v433
    %v450 = vmul.f32 %v396, %v434
    %v451 = vmul.f32 %v398, %v435
    %v452 = vmul.f32 %v400, %v436
    %v453 = vadd.f32 %v405, %v437
    %v454 = vadd.f32 %v406, %v438
    %v455 = vadd.f32 %v407, %v439
    %v456 = vadd.f32 %v408, %v440
    %v457 = vadd.f32 %v409, %v441
    %v458 = vadd.f32 %v410, %v442
    %v459 = vadd.f32 %v411, %v443
    %v460 = vadd.f32 %v412, %v444
    %v461 = vadd.f32 %v413, %v445
    %v462 = vadd.f32 %v414, %v446
    %v463 = vadd.f32 %v415, %v447
    %v464 = vadd.f32 %v416, %v448
    %v465 = vadd.f32 %v417, %v449
    %v466 = vadd.f32 %v418, %v450
    %v467 = vadd.f32 %v419, %v451
    %v468 = vadd.f32 %v420, %v452
    %469 = vst [vmem:[#allocation7] sm:$0xff] %v453
    %470 = vst [vmem:[#allocation7 + $0x8] sm:$0xff] %v454
    %471 = vst [vmem:[#allocation7 + $0x10] sm:$0xff] %v455
    %472 = vst [vmem:[#allocation7 + $0x18] sm:$0xff] %v456
    %473 = vst [vmem:[#allocation7 + $0x20] sm:$0xff] %v457
    %474 = vst [vmem:[#allocation7 + $0x28] sm:$0xff] %v458
    %475 = vst [vmem:[#allocation7 + $0x30] sm:$0xff] %v459
    %476 = vst [vmem:[#allocation7 + $0x38] sm:$0xff] %v460
    %477 = vst [vmem:[#allocation7 + $0x40] sm:$0xff] %v461
    %478 = vst [vmem:[#allocation7 + $0x48] sm:$0xff] %v462
    %479 = vst [vmem:[#allocation7 + $0x50] sm:$0xff] %v463
    %480 = vst [vmem:[#allocation7 + $0x58] sm:$0xff] %v464
    %481 = vst [vmem:[#allocation7 + $0x60] sm:$0xff] %v465
    %482 = vst [vmem:[#allocation7 + $0x68] sm:$0xff] %v466
    %483 = vst [vmem:[#allocation7 + $0x70] sm:$0xff] %v467
    %484 = vst [vmem:[#allocation7 + $0x78] sm:$0xff] %v468
    // Predicated region
    $region22: #{tpu_custom_call.1} parent=1 // pred_check
      _
    $region23: #{tpu_custom_call.1} parent=1 // pred_check_branch
      %486 = sbr.rel (0) target = $region25
    $region24: #{tpu_custom_call.1} parent=1 // pred_region
      %s488 = ssub.s32 2048, 2048
      %489 = vsyncadd [#allocation4], %s488
      %s490 = sshll.u32 [#allocation7], 4
      %s491 = int_to_ptr.vmem [resolvable:$true] %s490
      %496 = dma.vmem_to_hbm [thread:$0]  %s491, 2048, %s3, [#allocation4], 128, 128, 8
    $region25: #{tpu_custom_call.1} parent=1 // pred_fallthru
      _
    // Predicated region
    $region26: #{tpu_custom_call.1} parent=1 // pred_check
      _
    $region27: #{tpu_custom_call.1} parent=1 // pred_check_branch
      %498 = sbr.rel (0) target = $region29
    $region28: #{tpu_custom_call.1} parent=1 // pred_region
      %499 = dma.done [#allocation4], 2048
    $region29: #{tpu_custom_call.1} parent=1 // pred_fallthru
      _
    %500 = vsyncpa [#allocation3], 1
    %501 = vsyncpa [#allocation6], 1
    %502 = vsyncpa [#allocation4], 1

</llo_original>
